<compile_context>
chip_gen: v5e
topology: v5e:2x2
jax: 0.10.0
libtpu: 0.0.40
codegen_flags: <defaults>
</compile_context>

<pallas_src>
import jax
import jax.numpy as jnp
from jax.experimental import pallas as pl
from jax.experimental.pallas import tpu as pltpu


def _round_up(x: int, m: int) -> int:
    return (x + m - 1) // m * m


def _pick_tile(total: int, target: int, unit: int) -> int:
    """Largest multiple of `unit` <= min(target, total) that divides `total`."""
    t = min(target, total)
    t = max(unit, (t // unit) * unit)
    for cand in range(t, unit - 1, -unit):
        if total % cand == 0:
            return cand
    return unit


# ----------------------------------------------------------------------------
# Kernels
# ----------------------------------------------------------------------------
def _decoder_kernel(x_ref, w_ref, b_ref, stats_ref, o_ref):
    # x_ref     : (tile_b, Kp)      bf16 latent tile (full, resident K)
    # w_ref     : (Kp, tile_n)      bf16 weight column panel
    # b_ref     : (1, tile_n)       f32 bias tile
    # stats_ref : (tile_b, 2)       f32 per-sample [mean, std] (= org_norm[ids])
    # o_ref     : (tile_b, tile_n)  output tile
    h = jnp.dot(x_ref[...], w_ref[...], preferred_element_type=jnp.float32)
    h = h + b_ref[...]
    o_ref[...] = (h * stats_ref[:, 1:2] + stats_ref[:, 0:1]).astype(o_ref.dtype)


def _decoder_kernel_ktiled(x_ref, w_ref, b_ref, stats_ref, o_ref, acc_ref):
    # Fallback for very large latent dims: K-tiled with f32 accumulator.
    k = pl.program_id(2)
    partial = jnp.dot(x_ref[...], w_ref[...], preferred_element_type=jnp.float32)

    @pl.when(k == 0)
    def _first():
        acc_ref[...] = partial          # direct write: no zero-init store pass

    @pl.when(k > 0)
    def _accumulate():
        acc_ref[...] += partial

    @pl.when(k == pl.num_programs(2) - 1)
    def _finalize():
        h = acc_ref[...] + b_ref[...]
        o_ref[...] = (h * stats_ref[:, 1:2] + stats_ref[:, 0:1]).astype(o_ref.dtype)


# ----------------------------------------------------------------------------
# Wrappers
# ----------------------------------------------------------------------------
def prepare_decoder_params(w, b, compute_dtype=jnp.bfloat16):
    """One-time cast + 128-granular zero-padding of (W, b).

    Call once at decoder init (like registering parameters), NOT per forward
    step, so the kernel streams W straight from HBM in bf16 with no wrapper
    copy. Padded K rows of W are zero, so they contribute nothing to the dot.
    """
    K, N = w.shape
    Kp, Np = _round_up(K, 128), _round_up(N, 128)
    w_c = w.astype(compute_dtype)
    if (Kp, Np) != (K, N):
        w_c = jnp.zeros((Kp, Np), compute_dtype).at[:K, :N].set(w_c)
    b_c = b.astype(jnp.float32).reshape(1, N)
    if Np != N:
        b_c = jnp.zeros((1, Np), jnp.float32).at[:, :N].set(b_c)
    return w_c, b_c


def decoder_forward(x, w_p, b_p, org_norm, ids, *, out_dim,
                    tile_b: int = 256, tile_n: int = 1024, tile_k: int = 512,
                    out_dtype=jnp.float32, max_resident_k: int = 2048):
    """Pallas decoder head: (x @ W + b) * std[ids] + mean[ids].

    `w_p`, `b_p` must come from `prepare_decoder_params` (bf16, 128-padded).
    """
    B, latent_dim = x.shape
    Kp, Np = w_p.shape
    assert Kp % 128 == 0 and Np % 128 == 0
    assert Kp >= latent_dim and Np >= out_dim
    compute_dtype = w_p.dtype

    Bp = _round_up(B, 16)     # bf16 sublane packing granularity

    # Activations: cast per-call (cheap); pad only if ragged. Padded K columns
    # of x multiply zero-padded W rows, so they cannot corrupt the dot.
    x_c = x.astype(compute_dtype)
    if (Bp, Kp) != (B, latent_dim):
        x_c = jnp.zeros((Bp, Kp), compute_dtype).at[:B, :latent_dim].set(x_c)

    # Tiny data-dependent gather of per-sample (mean, std) stays in XLA; a
    # single (Bp, 2) f32 stream feeds the kernel.
    stats = jnp.take(org_norm, ids, axis=0).astype(jnp.float32)          # (B, 2)
    if Bp != B:
        stats = jnp.zeros((Bp, 2), jnp.float32).at[:B].set(stats)

    # Tiles divide the 128/16-padded problem (no rounding up to the tile).
    tile_b = _pick_tile(Bp, tile_b, 16)
    tile_n = _pick_tile(Np, tile_n, 128)
    nb, nn = Bp // tile_b, Np // tile_n

    # v7x has 2 TensorCores: guarantee >= 2 blocks along a parallel axis.
    if nb * nn == 1:
        if Np >= 256:
            tile_n = _pick_tile(Np, Np // 2, 128)
        elif Bp >= 32:
            tile_b = _pick_tile(Bp, Bp // 2, 16)
        nb, nn = Bp // tile_b, Np // tile_n

    itemsize = jnp.dtype(compute_dtype).itemsize
    out_itemsize = jnp.dtype(out_dtype).itemsize

    if Kp <= max_resident_k:
        # ---- Main path: no K grid axis, W panel resident across the B sweep.
        vmem_need = (2 * tile_b * Kp * itemsize          # x (double-buffered)
                     + 2 * Kp * tile_n * itemsize        # W column panel
                     + 2 * tile_b * tile_n * out_itemsize  # output
                     + 2 * 8 * tile_n * 4                # bias (sublane-padded)
                     + 2 * tile_b * 128 * 4)             # stats (lane-padded)
        vmem_limit = int(min(max(2 * vmem_need, 8 << 20), 48 << 20))

        out_p = pl.pallas_call(
            _decoder_kernel,
            out_shape=jax.ShapeDtypeStruct((Bp, Np), out_dtype),
            grid_spec=pltpu.PrefetchScalarGridSpec(
                num_scalar_prefetch=0,
                grid=(nn, nb),     # ni outer: W block index constant over bi
                in_specs=[
                    pl.BlockSpec((tile_b, Kp), lambda ni, bi: (bi, 0)),
                    pl.BlockSpec((Kp, tile_n), lambda ni, bi: (0, ni)),
                    pl.BlockSpec((1, tile_n), lambda ni, bi: (0, ni)),
                    pl.BlockSpec((tile_b, 2), lambda ni, bi: (bi, 0)),
                ],
                out_specs=pl.BlockSpec((tile_b, tile_n),
                                       lambda ni, bi: (bi, ni)),
            ),
            compiler_params=pltpu.CompilerParams(
                dimension_semantics=("parallel", "parallel"),
                vmem_limit_bytes=vmem_limit,
            ),
        )(x_c, w_p, b_p, stats)
    else:
        # ---- Fallback: very large latent dim -> K-tiled with f32 accumulator.
        tile_k = _pick_tile(Kp, tile_k, 128)
        nk = Kp // tile_k
        vmem_need = (2 * tile_b * tile_k * itemsize
                     + 2 * tile_k * tile_n * itemsize
                     + 2 * tile_b * tile_n * out_itemsize
                     + tile_b * tile_n * 4               # accumulator scratch
                     + 2 * 8 * tile_n * 4
                     + 2 * tile_b * 128 * 4)
        vmem_limit = int(min(max(2 * vmem_need, 8 << 20), 48 << 20))

        out_p = pl.pallas_call(
            _decoder_kernel_ktiled,
            out_shape=jax.ShapeDtypeStruct((Bp, Np), out_dtype),
            grid_spec=pltpu.PrefetchScalarGridSpec(
                num_scalar_prefetch=0,
                grid=(nb, nn, nk),                        # reduction axis last
                in_specs=[
                    pl.BlockSpec((tile_b, tile_k), lambda bi, ni, ki: (bi, ki)),
                    pl.BlockSpec((tile_k, tile_n), lambda bi, ni, ki: (ki, ni)),
                    pl.BlockSpec((1, tile_n), lambda bi, ni, ki: (0, ni)),
                    pl.BlockSpec((tile_b, 2), lambda bi, ni, ki: (bi, 0)),
                ],
                out_specs=pl.BlockSpec((tile_b, tile_n),
                                       lambda bi, ni, ki: (bi, ni)),
                scratch_shapes=[pltpu.VMEM((tile_b, tile_n), jnp.float32)],
            ),
            compiler_params=pltpu.CompilerParams(
                dimension_semantics=("parallel", "parallel", "arbitrary"),
                vmem_limit_bytes=vmem_limit,
            ),
        )(x_c, w_p, b_p, stats)

    if (Bp, Np) == (B, out_dim):
        return out_p                      # fast path: no output copy
    return out_p[:B, :out_dim]


# ----------------------------------------------------------------------------
# References
# ----------------------------------------------------------------------------
def decoder_forward_ref(x, w, b, org_norm, ids, compute_dtype=jnp.bfloat16):
    """Plain-JAX reference (same bf16-input / f32-accumulate numerics)."""
    stats = jnp.take(org_norm, ids, axis=0).astype(jnp.float32)
    mean, std = stats[:, 0:1], stats[:, 1:2]
    h = jnp.dot(x.astype(compute_dtype), w.astype(compute_dtype),
                preferred_element_type=jnp.float32)
    return (h + b.reshape(1, -1).astype(jnp.float32)) * std + mean


def decoder_forward_ref_f32(x, w, b, org_norm, ids):
    """Full-f32 reference for a loose semantic sanity check."""
    stats = jnp.take(org_norm, ids, axis=0)
    mean, std = stats[:, 0:1], stats[:, 1:2]
    return (x @ w + b.reshape(1, -1)) * std + mean


# ----------------------------------------------------------------------------
# Main
# ----------------------------------------------------------------------------
if __name__ == "__main__":
    def _run_case(seed, B, latent_dim, out_dim, num_ids):
        key = jax.random.PRNGKey(seed)
        k_x, k_w, k_b, k_norm, k_ids = jax.random.split(key, 5)

        x = jax.random.normal(k_x, (B, latent_dim), dtype=jnp.float32)
        w = jax.random.normal(k_w, (latent_dim, out_dim), dtype=jnp.float32) * 0.02
        b = jax.random.normal(k_b, (out_dim,), dtype=jnp.float32) * 0.01
        # org_norm: per-id (mean, std); std kept positive. Trainable in torch,
        # a plain array here (finetune_org_norm only toggles requires_grad).
        mean_col = jax.random.normal(k_norm, (num_ids, 1), dtype=jnp.float32)
        std_col = jnp.abs(jax.random.normal(jax.random.fold_in(k_norm, 1),
                                            (num_ids, 1), dtype=jnp.float32)) + 0.5
        org_norm = jnp.concatenate([mean_col, std_col], axis=1)     # (num_ids, 2)
        ids = jax.random.randint(k_ids, (B,), 0, num_ids, dtype=jnp.int32)

        # One-time weight preparation (analogous to module init).
        w_p, b_p = prepare_decoder_params(w, b)

        out = decoder_forward(x, w_p, b_p, org_norm, ids, out_dim=out_dim)
        out = jax.block_until_ready(out)

        ref_bf16 = decoder_forward_ref(x, w, b, org_norm, ids)
        ref_f32 = decoder_forward_ref_f32(x, w, b, org_norm, ids)

        assert out.shape == (B, out_dim)
        assert jnp.allclose(out, ref_bf16, atol=1e-4, rtol=1e-4), \
            f"case {seed}: mismatch vs bf16-input reference"
        assert jnp.allclose(out, ref_f32, atol=5e-2, rtol=5e-2), \
            f"case {seed}: mismatch vs f32 reference (beyond bf16 tolerance)"

    # Small shapes consistent with the module's __init__ signature.
    _run_case(seed=0, B=8, latent_dim=32, out_dim=256, num_ids=16)
    # Ragged shapes exercise the padding / tail-slice path.
    _run_case(seed=1, B=5, latent_dim=48, out_dim=200, num_ids=7)

    print("KERNEL_OK")
</pallas_src>

<mosaic_0001>
module attributes {stable_mosaic.version = 11 : i64} {
  func.func @_decoder_kernel(%arg0: i32, %arg1: i32, %arg2: memref<16x128xbf16, #tpu.memory_space<vmem>>, %arg3: memref<128x128xbf16, #tpu.memory_space<vmem>>, %arg4: memref<1x128xf32, #tpu.memory_space<vmem>>, %arg5: memref<16x2xf32, #tpu.memory_space<vmem>>, %arg6: memref<16x128xf32, #tpu.memory_space<vmem>>) attributes {dimension_semantics = [#tpu.dimension_semantics<parallel>, #tpu.dimension_semantics<parallel>], iteration_bounds = array<i64: 2, 1>, scalar_prefetch = 0 : i64, scratch_operands = 0 : i64, tpu.core_type = #tpu.core_type<tc>, window_params = [{transform_indices = @transform_0, window_bounds = array<i64: 16, 128>}, {transform_indices = @transform_1, window_bounds = array<i64: 128, 128>}, {transform_indices = @transform_2, window_bounds = array<i64: 1, 128>}, {transform_indices = @transform_3, window_bounds = array<i64: 16, 2>}, {transform_indices = @transform_4, window_bounds = array<i64: 16, 128>}]} {
    %c0 = arith.constant 0 : index
    %c0_0 = arith.constant 0 : index
    %0 = vector.load %arg2[%c0, %c0_0] : memref<16x128xbf16, #tpu.memory_space<vmem>>, vector<16x128xbf16>
    %c0_1 = arith.constant 0 : index
    %c0_2 = arith.constant 0 : index
    %1 = vector.load %arg3[%c0_1, %c0_2] : memref<128x128xbf16, #tpu.memory_space<vmem>>, vector<128x128xbf16>
    %cst = arith.constant dense<0.000000e+00> : vector<16x128xf32>
    %2 = tpu.matmul %0, %1, %cst {dimension_numbers = #tpu.dot_dimension_numbers<[1], [0], [0], [1], [0, 0, 1, 1], [], []>} : vector<16x128xbf16>, vector<128x128xbf16>, vector<16x128xf32> -> vector<16x128xf32>
    %c0_3 = arith.constant 0 : index
    %c0_4 = arith.constant 0 : index
    %3 = vector.load %arg4[%c0_3, %c0_4] : memref<1x128xf32, #tpu.memory_space<vmem>>, vector<1x128xf32>
    %4 = vector.broadcast %3 : vector<1x128xf32> to vector<16x128xf32>
    %5 = arith.addf %2, %4 : vector<16x128xf32>
    %c0_5 = arith.constant 0 : index
    %c1 = arith.constant 1 : index
    %6 = vector.load %arg5[%c0_5, %c1] : memref<16x2xf32, #tpu.memory_space<vmem>>, vector<16x1xf32>
    %7 = vector.broadcast %6 : vector<16x1xf32> to vector<16x128xf32>
    %8 = arith.mulf %5, %7 : vector<16x128xf32>
    %c0_6 = arith.constant 0 : index
    %c0_7 = arith.constant 0 : index
    %9 = vector.load %arg5[%c0_6, %c0_7] : memref<16x2xf32, #tpu.memory_space<vmem>>, vector<16x1xf32>
    %10 = vector.broadcast %9 : vector<16x1xf32> to vector<16x128xf32>
    %11 = arith.addf %8, %10 : vector<16x128xf32>
    %c0_8 = arith.constant 0 : index
    %c0_9 = arith.constant 0 : index
    %12 = vector.load %arg6[%c0_8, %c0_9] : memref<16x128xf32, #tpu.memory_space<vmem>>, vector<16x128xf32>
    tpu.vector_store %arg6[%c0_8, %c0_9], %11 {strides = array<i32>} : memref<16x128xf32, #tpu.memory_space<vmem>>, vector<16x128xf32>,
    return
  }
  func.func @transform_0(%arg0: i32, %arg1: i32) -> (i32, i32) {
    %c0_i32 = arith.constant 0 : i32
    %c0_i32_0 = arith.constant 0 : i32
    return %arg1, %c0_i32 : i32, i32
  }
  func.func @transform_1(%arg0: i32, %arg1: i32) -> (i32, i32) {
    %c0_i32 = arith.constant 0 : i32
    %c0_i32_0 = arith.constant 0 : i32
    return %c0_i32, %arg0 : i32, i32
  }
  func.func @transform_2(%arg0: i32, %arg1: i32) -> (i32, i32) {
    %c0_i32 = arith.constant 0 : i32
    %c0_i32_0 = arith.constant 0 : i32
    return %c0_i32, %arg0 : i32, i32
  }
  func.func @transform_3(%arg0: i32, %arg1: i32) -> (i32, i32) {
    %c0_i32 = arith.constant 0 : i32
    %c0_i32_0 = arith.constant 0 : i32
    return %arg1, %c0_i32 : i32, i32
  }
  func.func @transform_4(%arg0: i32, %arg1: i32) -> (i32, i32) {
    %c0_i32 = arith.constant 0 : i32
    return %arg1, %arg0 : i32, i32
  }
}

</mosaic_0001>

<llo_original>
// kernel: tpu_custom_call.1
$region0: #{tpu_custom_call.1}
  #allocation0 [shape = 'u32[]', space=smem, size = 0x4, offset = 0x4, fixed_abs, tag = 'smem constant byte address 0x4 - core index']
  #allocation1 [shape = 'u32[72,128]{1,0:T(1,128)}', space=vmem, size = 0x9000, scoped, tag = 'internal scratch']
  %s0 = inlined_call_operand.vmem [shape: bf16[16,128], index: 0, kind: input, shape index: {}]
  %s1 = inlined_call_operand.hbm [shape: bf16[128,256], index: 1, kind: input, shape index: {}]
  %s2 = inlined_call_operand.vmem [shape: f32[1,256], index: 2, kind: input, shape index: {}]
  %s3 = inlined_call_operand.vmem [shape: f32[16,2], index: 3, kind: input, shape index: {}]
  %s4 = inlined_call_operand.hbm [shape: f32[16,256], index: 4, kind: output, shape index: {}]
  %s5 = sld [smem:[#allocation0]]
  $region53: #{tpu_custom_call.1} parent=0
    _
  %s7 = ssub.s32 1, %s5
  %s8 = scalar_select 0, %s7, %s5
  $region1: #{tpu_custom_call.1} parent=0
    #allocation2 [shape = 'u8[65536]{0}', space=vmem, size = 0x10000, scoped, tag = 'input window, operand 1']
    #allocation3 [shape = 's32[2]{0}', space=sflag, size = 0x8, scoped, tag = 'scoped memory for tpu_custom_call.1']
    #allocation4 [shape = 's32[2]{0}', space=sflag, size = 0x8, scoped, tag = 'scoped memory for tpu_custom_call.1']
    #allocation5 [shape = 'u8[16384]{0}', space=vmem, size = 0x4000, scoped, tag = 'output window, operand 0']
    %9 = vsyncpa [#allocation3], 0
    %s10 = scalar_lea.sflag [#allocation3], 1
    %11 = vsyncpa %s10, 0
    %12 = vsyncpa [#allocation4], 0
    %s13 = scalar_lea.sflag [#allocation4], 1
    %14 = vsyncpa %s13, 0
    loop: start=0, step=1, limit=4
    $region2: #{tpu_custom_call.1} parent=1 // loop_pre_header
      _
    $region3: #{tpu_custom_call.1} parent=1 // loop_header
      %s16 = sphi 0, %s20
      %p17 = scmp.ge.s32.totalorder %s16, 4
      %s23 = sphi 0, %s35
      %s24 = sphi 0, %s31
      %s25 = sphi 0, %s23
      %s26 = sphi 0, %s24
      %s27 = sphi 0, %s25
      %s28 = sphi 0, %s26
      %s38 = sphi 0, %s40
      %s41 = sphi 0, %s38
      %s42 = sphi 0, %s41
      %s58 = sphi 0, %s42
      %s64 = sphi 0, %s66
      %s67 = sphi 0, %s64
      %s68 = sphi 0, %s67
      %s84 = sphi 0, %s68
      %s90 = sphi 0, %s92
      %s93 = sphi 0, %s90
      %s94 = sphi 0, %s93
      %s110 = sphi 0, %s94
      %s116 = sphi 0, %s118
      %s119 = sphi 0, %s116
      %s120 = sphi 0, %s119
      %s136 = sphi 0, %s120
      %s144 = sphi 0, %s146
      %s147 = sphi 0, %s144
      %s148 = sphi 0, %s147
      %s164 = sphi 0, %s148
    $region4: #{tpu_custom_call.1} parent=1 // loop_header_branch
      %19 = sbr.rel (%p17) target = $region8
    $region5: #{tpu_custom_call.1} parent=1 // loop_body
      %s21 = ssub.s32 %s16, 1
      %s22 = ssub.s32 %s16, 2
      %s29 = sadd.s32 1, %s24
      %p30 = scmp.ge.s32.totalorder %s29, 1
      %s31 = scalar_select %p30, 0, %s29
      %s32 = sadd.s32 1, %s23
      %s33 = scalar_select %p30, %s32, %s23
      %p34 = scmp.ge.s32.totalorder %s33, 2
      %s35 = scalar_select %p34, 0, %s33
      %s36 = ssub.s32 %s24, %s31
      %p37 = scmp.eq.s32.totalorder %s36, 0
      %s39 = sadd.s32 %s38, 1
      %s40 = scalar_select %p37, %s38, %s39
      %p43 = pneg %p37
      %p44 = scmp.eq.s32.totalorder %s16, 1
      %p45 = por %p43, %p44
      %p46 = scmp.ne.s32.totalorder %s38, %s41
      %p47 = scmp.eq.s32.totalorder %s16, 0
      %p48 = por %p46, %p47
      %p49 = scmp.ne.s32.totalorder %s38, %s41
      %p50 = scmp.eq.s32.totalorder %s21, 1
      %p51 = por %p49, %p50
      %p52 = scmp.ne.s32.totalorder %s41, %s42
      %p53 = scmp.eq.s32.totalorder %s21, 0
      %p54 = por %p52, %p53
      %p55 = scmp.ne.s32.totalorder %s41, %s42
      %p56 = scmp.eq.s32.totalorder %s22, 1
      %p57 = por %p55, %p56
      %p59 = scmp.ne.s32.totalorder %s42, %s58
      %p60 = scmp.eq.s32.totalorder %s22, 0
      %p61 = por %p59, %p60
      %s62 = ssub.s32 %s23, %s35
      %p63 = scmp.eq.s32.totalorder %s62, 0
      %s65 = sadd.s32 %s64, 1
      %s66 = scalar_select %p63, %s64, %s65
      %p69 = pneg %p63
      %p70 = scmp.eq.s32.totalorder %s16, 1
      %p71 = por %p69, %p70
      %p72 = scmp.ne.s32.totalorder %s64, %s67
      %p73 = scmp.eq.s32.totalorder %s16, 0
      %p74 = por %p72, %p73
      %p75 = scmp.ne.s32.totalorder %s64, %s67
      %p76 = scmp.eq.s32.totalorder %s21, 1
      %p77 = por %p75, %p76
      %p78 = scmp.ne.s32.totalorder %s67, %s68
      %p79 = scmp.eq.s32.totalorder %s21, 0
      %p80 = por %p78, %p79
      %p81 = scmp.ne.s32.totalorder %s67, %s68
      %p82 = scmp.eq.s32.totalorder %s22, 1
      %p83 = por %p81, %p82
      %p85 = scmp.ne.s32.totalorder %s68, %s84
      %p86 = scmp.eq.s32.totalorder %s22, 0
      %p87 = por %p85, %p86
      %s88 = ssub.s32 %s23, %s35
      %p89 = scmp.eq.s32.totalorder %s88, 0
      %s91 = sadd.s32 %s90, 1
      %s92 = scalar_select %p89, %s90, %s91
      %p95 = pneg %p89
      %p96 = scmp.eq.s32.totalorder %s16, 1
      %p97 = por %p95, %p96
      %p98 = scmp.ne.s32.totalorder %s90, %s93
      %p99 = scmp.eq.s32.totalorder %s16, 0
      %p100 = por %p98, %p99
      %p101 = scmp.ne.s32.totalorder %s90, %s93
      %p102 = scmp.eq.s32.totalorder %s21, 1
      %p103 = por %p101, %p102
      %p104 = scmp.ne.s32.totalorder %s93, %s94
      %p105 = scmp.eq.s32.totalorder %s21, 0
      %p106 = por %p104, %p105
      %p107 = scmp.ne.s32.totalorder %s93, %s94
      %p108 = scmp.eq.s32.totalorder %s22, 1
      %p109 = por %p107, %p108
      %p111 = scmp.ne.s32.totalorder %s94, %s110
      %p112 = scmp.eq.s32.totalorder %s22, 0
      %p113 = por %p111, %p112
      %s114 = ssub.s32 %s24, %s31
      %p115 = scmp.eq.s32.totalorder %s114, 0
      %s117 = sadd.s32 %s116, 1
      %s118 = scalar_select %p115, %s116, %s117
      %p121 = pneg %p115
      %p122 = scmp.eq.s32.totalorder %s16, 1
      %p123 = por %p121, %p122
      %p124 = scmp.ne.s32.totalorder %s116, %s119
      %p125 = scmp.eq.s32.totalorder %s16, 0
      %p126 = por %p124, %p125
      %p127 = scmp.ne.s32.totalorder %s116, %s119
      %p128 = scmp.eq.s32.totalorder %s21, 1
      %p129 = por %p127, %p128
      %p130 = scmp.ne.s32.totalorder %s119, %s120
      %p131 = scmp.eq.s32.totalorder %s21, 0
      %p132 = por %p130, %p131
      %p133 = scmp.ne.s32.totalorder %s119, %s120
      %p134 = scmp.eq.s32.totalorder %s22, 1
      %p135 = por %p133, %p134
      %p137 = scmp.ne.s32.totalorder %s120, %s136
      %p138 = scmp.eq.s32.totalorder %s22, 0
      %p139 = por %p137, %p138
      %s140 = ssub.s32 %s24, %s31
      %s141 = ssub.s32 %s23, %s35
      %s142 = sor.u32 %s140, %s141
      %p143 = scmp.eq.s32.totalorder %s142, 0
      %s145 = sadd.s32 %s144, 1
      %s146 = scalar_select %p143, %s144, %s145
      %p149 = pneg %p143
      %p150 = scmp.eq.s32.totalorder %s16, 1
      %p151 = por %p149, %p150
      %p152 = scmp.ne.s32.totalorder %s144, %s147
      %p153 = scmp.eq.s32.totalorder %s16, 0
      %p154 = por %p152, %p153
      %p155 = scmp.ne.s32.totalorder %s144, %s147
      %p156 = scmp.eq.s32.totalorder %s21, 1
      %p157 = por %p155, %p156
      %p158 = scmp.ne.s32.totalorder %s147, %s148
      %p159 = scmp.eq.s32.totalorder %s21, 0
      %p160 = por %p158, %p159
      %p161 = scmp.ne.s32.totalorder %s147, %s148
      %p162 = scmp.eq.s32.totalorder %s22, 1
      %p163 = por %p161, %p162
      %p165 = scmp.ne.s32.totalorder %s148, %s164
      %p166 = scmp.eq.s32.totalorder %s22, 0
      %p167 = por %p165, %p166
      %p168 = scmp.le.s32.totalorder 1, %s16
      %p169 = scmp.lt.s32.totalorder %s16, 3
      %p170 = pnand %p168, %p169
      %p171 = pneg %p170
      // Predicated region
      $region9: #{tpu_custom_call.1} parent=5 // pred_check
        _
      $region10: #{tpu_custom_call.1} parent=5 // pred_check_branch
        %173 = sbr.rel (%p170) target = $region12
      $region11: #{tpu_custom_call.1} parent=5 // pred_region
        %s174 = ssub.s32 %s16, 1
        // Predicated region
        $region13: #{tpu_custom_call.1} parent=11 // pred_check
          %p175 = pneg %p54
        $region14: #{tpu_custom_call.1} parent=11 // pred_check_branch
          %177 = sbr.rel (%p175) target = $region16
        $region15: #{tpu_custom_call.1} parent=11 // pred_region
          %s178 = smul.u32 2, %s26
          %p179 = scmp.lt.s32.totalorder %s178, 1
          %s180 = scalar_select %p179, %s178, 1
          %s181 = smul.addr %s180, 4
          %s182 = scalar_lea.vmem %s0, %s181
          %s183 = smul.u32 2, %s26
        $region16: #{tpu_custom_call.1} parent=11 // pred_fallthru
          _
        // Predicated region
        $region17: #{tpu_custom_call.1} parent=11 // pred_check
          %p184 = pneg %p132
        $region18: #{tpu_custom_call.1} parent=11 // pred_check_branch
          %186 = sbr.rel (%p184) target = $region20
        $region19: #{tpu_custom_call.1} parent=11 // pred_region
          %s187 = smul.u32 2, %s26
          %p188 = scmp.lt.s32.totalorder %s187, 1
          %s189 = scalar_select %p188, %s187, 1
          %s190 = smul.addr %s189, 8
          %s191 = scalar_lea.vmem %s3, %s190
          %s192 = smul.u32 2, %s26
        $region20: #{tpu_custom_call.1} parent=11 // pred_fallthru
          _
      $region12: #{tpu_custom_call.1} parent=5 // pred_fallthru
        _
      %p193 = scmp.lt.s32.totalorder %s16, 2
      // Predicated region
      $region21: #{tpu_custom_call.1} parent=5 // pred_check
        %p194 = pneg %p193
      $region22: #{tpu_custom_call.1} parent=5 // pred_check_branch
        %196 = sbr.rel (%p194) target = $region24
      $region23: #{tpu_custom_call.1} parent=5 // pred_region
        // Predicated region
        $region25: #{tpu_custom_call.1} parent=23 // pred_check
          %p197 = pneg %p74
        $region26: #{tpu_custom_call.1} parent=23 // pred_check_branch
          %199 = sbr.rel (%p197) target = $region28
        $region27: #{tpu_custom_call.1} parent=23 // pred_region
          %s200 = sand.u32 %s64, 1
          %s201 = scalar_lea.sflag [#allocation3], %s200
          %s202 = sand.u32 %s64, 1
          %s203 = smul.addr %s202, 64
          %s204 = scalar_lea.vmem [#allocation2], %s203
          %206 = vsyncadd %s201, 0
          %s207 = smul.addr %s23, 4
          %s208 = scalar_lea.hbm %s1, %s207
          %s209 = sshll.u32 %s208, 4
          %s210 = int_to_ptr.hbm [resolvable:$true] %s209
          %s211 = sshll.u32 %s204, 4
          %s212 = int_to_ptr.vmem [resolvable:$true] %s211
          %217 = dma.hbm_to_vmem [thread:$0]  %s210, 1024, %s212, %s201, 128, 64, 4
        $region28: #{tpu_custom_call.1} parent=23 // pred_fallthru
          _
        // Predicated region
        $region29: #{tpu_custom_call.1} parent=23 // pred_check
          %p218 = pneg %p100
        $region30: #{tpu_custom_call.1} parent=23 // pred_check_branch
          %220 = sbr.rel (%p218) target = $region32
        $region31: #{tpu_custom_call.1} parent=23 // pred_region
          %p221 = scmp.lt.s32.totalorder %s23, 1
          %s222 = scalar_select %p221, %s23, 1
          %s223 = scalar_lea.vmem %s2, %s222
        $region32: #{tpu_custom_call.1} parent=23 // pred_fallthru
          _
      $region24: #{tpu_custom_call.1} parent=5 // pred_fallthru
        _
      %p224 = scmp.le.s32.totalorder 1, %s16
      %p225 = scmp.lt.s32.totalorder %s16, 3
      %p226 = pnand %p224, %p225
      %p227 = pneg %p226
      // Predicated region
      $region33: #{tpu_custom_call.1} parent=5 // pred_check
        _
      $region34: #{tpu_custom_call.1} parent=5 // pred_check_branch
        %229 = sbr.rel (%p226) target = $region36
      $region35: #{tpu_custom_call.1} parent=5 // pred_region
        %s230 = ssub.s32 %s16, 1
        %s231 = sand.u32 %s67, 1
        %s232 = scalar_lea.sflag [#allocation3], %s231
        %s233 = sand.u32 %s67, 1
        %s234 = smul.addr %s233, 64
        %s235 = scalar_lea.vmem [#allocation2], %s234
        // Predicated region
        $region37: #{tpu_custom_call.1} parent=35 // pred_check
          %p236 = pneg %p80
        $region38: #{tpu_custom_call.1} parent=35 // pred_check_branch
          %238 = sbr.rel (%p236) target = $region40
        $region39: #{tpu_custom_call.1} parent=35 // pred_region
          %240 = dma.done %s232, 1024
        $region40: #{tpu_custom_call.1} parent=35 // pred_fallthru
          _
        %s241 = smul.u32 2, %s26
        %p242 = scmp.lt.s32.totalorder %s241, 1
        %s243 = scalar_select %p242, %s241, 1
        %s244 = smul.addr %s243, 4
        %s245 = scalar_lea.vmem %s0, %s244
        %p246 = pneg %p54
        %p247 = pneg %p51
        %s248 = sand.u32 %s67, 1
        %s249 = scalar_lea.sflag [#allocation3], %s248
        %s250 = sand.u32 %s67, 1
        %s251 = smul.addr %s250, 64
        %s252 = scalar_lea.vmem [#allocation2], %s251
        %p253 = pneg %p80
        %p254 = pneg %p77
        %p255 = scmp.lt.s32.totalorder %s25, 1
        %s256 = scalar_select %p255, %s25, 1
        %s257 = scalar_lea.vmem %s2, %s256
        %p258 = pneg %p106
        %p259 = pneg %p103
        %s260 = smul.u32 2, %s26
        %p261 = scmp.lt.s32.totalorder %s260, 1
        %s262 = scalar_select %p261, %s260, 1
        %s263 = smul.addr %s262, 8
        %s264 = scalar_lea.vmem %s3, %s263
        %p265 = pneg %p132
        %p266 = pneg %p129
        %p267 = pneg %p160
        %p268 = pneg %p157
        %s269 = sand.u32 %s147, 1
        %s270 = scalar_lea.sflag [#allocation4], %s269
        %s271 = sand.u32 %s147, 1
        %s272 = smul.addr %s271, 16
        %s273 = scalar_lea.vmem [#allocation5], %s272
        %s274 = smul.u32 2, %s26
        %p275 = scmp.lt.s32.totalorder %s274, 1
        %s276 = scalar_select %p275, %s274, 1
        %s277 = smul.addr %s276, 4
        %s278 = scalar_lea.vmem %s0, %s277
        %s279 = smul.u32 2, %s26
        %p280 = scmp.lt.s32.totalorder %s25, 1
        %s281 = scalar_select %p280, %s25, 1
        %s282 = scalar_lea.vmem %s2, %s281
        %s283 = smul.u32 2, %s26
        %p284 = scmp.lt.s32.totalorder %s283, 1
        %s285 = scalar_select %p284, %s283, 1
        %s286 = smul.addr %s285, 8
        %s287 = scalar_lea.vmem %s3, %s286
        %s288 = smul.u32 2, %s26
        %s289 = smul.u32 2, %s26
        %v290 = vld [vmem:[%s278] sm:$0xf]
        %v291 = vld [vmem:[%s278 + $0x4] sm:$0xf]
        %v292 = vld [vmem:[%s235] sm:$0xf]
        %v293 = vld [vmem:[%s235 + $0x4] sm:$0xf]
        %v294 = vld [vmem:[%s235 + $0x8] sm:$0xf]
        %v295 = vld [vmem:[%s235 + $0xc] sm:$0xf]
        %v296 = vld [vmem:[%s235 + $0x10] sm:$0xf]
        %v297 = vld [vmem:[%s235 + $0x14] sm:$0xf]
        %v298 = vld [vmem:[%s235 + $0x18] sm:$0xf]
        %v299 = vld [vmem:[%s235 + $0x1c] sm:$0xf]
        %v300 = vld [vmem:[%s235 + $0x20] sm:$0xf]
        %v301 = vld [vmem:[%s235 + $0x24] sm:$0xf]
        %v302 = vld [vmem:[%s235 + $0x28] sm:$0xf]
        %v303 = vld [vmem:[%s235 + $0x2c] sm:$0xf]
        %v304 = vld [vmem:[%s235 + $0x30] sm:$0xf]
        %v305 = vld [vmem:[%s235 + $0x34] sm:$0xf]
        %v306 = vld [vmem:[%s235 + $0x38] sm:$0xf]
        %v307 = vld [vmem:[%s235 + $0x3c] sm:$0xf]
        %v308 = vld [vmem:[%s282] sm:$0x1]
        %v310 = vperm.slane %v308, 0
        %v314 = vunpack.c.l.b16 %v290
        %v315 = vunpack.c.l.b16 %v291
        %v316 = vpack.c.b16 %v315, %v314
        %v334 = vunpack.c.l.b16 %v292
        %v335 = vunpack.c.l.b16 %v293
        %v336 = vunpack.c.l.b16 %v294
        %v337 = vunpack.c.l.b16 %v295
        %v338 = vunpack.c.l.b16 %v296
        %v339 = vunpack.c.l.b16 %v297
        %v340 = vunpack.c.l.b16 %v298
        %v341 = vunpack.c.l.b16 %v299
        %v342 = vunpack.c.l.b16 %v300
        %v343 = vunpack.c.l.b16 %v301
        %v344 = vunpack.c.l.b16 %v302
        %v345 = vunpack.c.l.b16 %v303
        %v346 = vunpack.c.l.b16 %v304
        %v347 = vunpack.c.l.b16 %v305
        %v348 = vunpack.c.l.b16 %v306
        %v349 = vunpack.c.l.b16 %v307
        %v350 = vpack.c.b16 %v335, %v334
        %v351 = vpack.c.b16 %v337, %v336
        %v352 = vpack.c.b16 %v339, %v338
        %v353 = vpack.c.b16 %v341, %v340
        %v354 = vpack.c.b16 %v343, %v342
        %v355 = vpack.c.b16 %v345, %v344
        %v356 = vpack.c.b16 %v347, %v346
        %v357 = vpack.c.b16 %v349, %v348
        %366 = vmatpush.bf16.msra.mxu0 %v357
        %367 = vmatpush.bf16.msra.mxu0 %v356
        %368 = vmatpush.bf16.msra.mxu0 %v355
        %369 = vmatpush.bf16.msra.mxu0 %v354
        %370 = vmatpush.bf16.msra.mxu0 %v353
        %371 = vmatpush.bf16.msra.mxu0 %v352
        %372 = vmatpush.bf16.msra.mxu0 %v351
        %373 = vmatpush.bf16.msra.mxu0 %v350
        %374 = vmatmul.bf16.gmra.mxu0 %v316
        %v375 = vpop.f32.mrf.mxu0
        %v376 = vadd.f32 %v310, %v375
        %v377 = vpop.f32.mrf.mxu0
        %v378 = vadd.f32 %v310, %v377
        %379 = vdwg.mxu0
        %v380 = vld [vmem:[%s287] sm:$0xff]
        %v381 = vld [vmem:[%s287 + $0x8] sm:$0xff]
        %383 = vset.pattern.permute.xlu0 1
        %384 = vperm.xlu0 %383, %v380
        %v385 = vpop.permute.xlu0 %384
        %388 = vset.pattern.permute.xlu0 1
        %389 = vperm.xlu0 %388, %v381
        %v390 = vpop.permute.xlu0 %389
        %v392 = vmul.f32 %v376, %v385
        %v393 = vmul.f32 %v378, %v390
        %394 = vset.pattern.permute.xlu0 0
        %395 = vperm.xlu0 %394, %v380
        %v396 = vpop.permute.xlu0 %395
        %398 = vset.pattern.permute.xlu0 0
        %399 = vperm.xlu0 %398, %v381
        %v400 = vpop.permute.xlu0 %399
        %v402 = vadd.f32 %v392, %v396
        %v403 = vadd.f32 %v393, %v400
        %404 = vst [vmem:[%s273] sm:$0xff] %v402
        %405 = vst [vmem:[%s273 + $0x8] sm:$0xff] %v403
        %s406 = sand.u32 %s147, 1
        %s407 = scalar_lea.sflag [#allocation4], %s406
        %s408 = sand.u32 %s147, 1
        %s409 = smul.addr %s408, 16
        %s410 = scalar_lea.vmem [#allocation5], %s409
        // Predicated region
        $region41: #{tpu_custom_call.1} parent=35 // pred_check
          %p411 = pneg %p157
        $region42: #{tpu_custom_call.1} parent=35 // pred_check_branch
          %413 = sbr.rel (%p411) target = $region44
        $region43: #{tpu_custom_call.1} parent=35 // pred_region
          %s414 = smul.u32 2, %s26
          %416 = vsyncadd %s407, 0
          %s417 = smul.addr %s414, 2
          %s418 = sadd.s32 %s25, %s417
          %s419 = smul.addr %s418, 8
          %s420 = scalar_lea.hbm %s4, %s419
          %s421 = sshll.u32 %s410, 4
          %s422 = int_to_ptr.vmem [resolvable:$true] %s421
          %s423 = sshll.u32 %s420, 4
          %s424 = int_to_ptr.hbm [resolvable:$true] %s423
          %429 = dma.vmem_to_hbm [thread:$0]  %s422, 256, %s424, %s407, 128, 256, 8
        $region44: #{tpu_custom_call.1} parent=35 // pred_fallthru
          _
      $region36: #{tpu_custom_call.1} parent=5 // pred_fallthru
        _
      %p430 = scmp.le.s32.totalorder 2, %s16
      // Predicated region
      $region45: #{tpu_custom_call.1} parent=5 // pred_check
        %p431 = pneg %p430
      $region46: #{tpu_custom_call.1} parent=5 // pred_check_branch
        %433 = sbr.rel (%p431) target = $region48
      $region47: #{tpu_custom_call.1} parent=5 // pred_region
        %s434 = ssub.s32 %s16, 2
        // Predicated region
        $region49: #{tpu_custom_call.1} parent=47 // pred_check
          %p435 = pneg %p163
        $region50: #{tpu_custom_call.1} parent=47 // pred_check_branch
          %437 = sbr.rel (%p435) target = $region52
        $region51: #{tpu_custom_call.1} parent=47 // pred_region
          %s438 = sand.u32 %s148, 1
          %s439 = scalar_lea.sflag [#allocation4], %s438
          %s440 = sand.u32 %s148, 1
          %s441 = smul.addr %s440, 16
          %s442 = scalar_lea.vmem [#allocation5], %s441
          %444 = dma.done %s439, 256
        $region52: #{tpu_custom_call.1} parent=47 // pred_fallthru
          _
      $region48: #{tpu_custom_call.1} parent=5 // pred_fallthru
        _
    $region6: #{tpu_custom_call.1} parent=1 // loop_footer
      %s20 = sadd.s32 1, %s16
    $region7: #{tpu_custom_call.1} parent=1 // loop_footer_branch
      %15 = sbr.rel target = $region3
    $region8: #{tpu_custom_call.1} parent=1 // loop_exit
      _
    %445 = vsyncpa [#allocation3], 1
    %s446 = scalar_lea.sflag [#allocation3], 1
    %447 = vsyncpa %s446, 1
    %448 = vsyncpa [#allocation4], 1
    %s449 = scalar_lea.sflag [#allocation4], 1
    %450 = vsyncpa %s449, 1

</llo_original>
